<compile_context>
chip_gen: v7x
topology: tpu7x:2x2x1
jax: 0.10.0
libtpu: 0.0.40
codegen_flags: <defaults>
</compile_context>

<pallas_src>
import functools

import jax
import jax.numpy as jnp
from jax.experimental import pallas as pl
from jax.experimental.pallas import tpu as pltpu


def _moving_avg_kernel(x_ref, o_ref, w_ref, *, kernel_size, stride, pad,
                       seq_len, t_blk):
    """x_ref: (B_BLK, L, C)      input block (full time axis, one batch tile)
       o_ref: (B_BLK, T_OUT, C)  output rows [t*T_OUT, (t+1)*T_OUT)
       w_ref: (T_OUT, L) bf16    scratch: banded window-count matrix W, where
                                 W[o, l] = #times original row l appears in the
                                 edge-replicated pooling window of output row o.
    """
    t = pl.program_id(0)          # output-time tile (outer, parallel)
    b = pl.program_id(1)          # batch tile       (inner, arbitrary)
    L = seq_len
    K = kernel_size

    # Build W once per output-time tile; it is reused for every batch tile.
    @pl.when(b == 0)
    def _build_window_matrix():
        o_row = jax.lax.broadcasted_iota(jnp.int32, (t_blk, 1), 0) + t * t_blk
        l_col = jax.lax.broadcasted_iota(jnp.int32, (t_blk, L), 1)
        a = o_row * stride                      # window start (padded coords)
        lo = a - pad                            # first fully-covered orig row
        hi = a + (K - 1 - pad)                  # last fully-covered orig row
        inside = jnp.logical_and(l_col >= lo, l_col <= hi)
        # Edge-replicated rows: row 0 absorbs all padded indices p <= pad,
        # row L-1 absorbs all p >= L-1+pad.  Counts are exact small integers.
        cnt_first = jnp.clip(pad + 1 - a, 0, K).astype(jnp.float32)
        cnt_last = jnp.clip(a + K - (L - 1 + pad), 0, K).astype(jnp.float32)
        w = jnp.where(l_col == 0, cnt_first,
                      jnp.where(l_col == L - 1, cnt_last,
                                inside.astype(jnp.float32)))
        w_ref[...] = w.astype(jnp.bfloat16)     # counts <= K are exact in bf16

    w = w_ref[...]
    inv_k = 1.0 / K
    input_is_bf16 = jnp.dtype(x_ref.dtype) == jnp.dtype(jnp.bfloat16)

    # One (T_OUT, L) @ (L, C) MXU matmul per batch element in the block.
    for bi in range(x_ref.shape[0]):            # static unroll (B_BLK small)
        xb = x_ref[bi]                           # (L, C)
        x_hi = xb.astype(jnp.bfloat16)
        acc = jnp.dot(w, x_hi, preferred_element_type=jnp.float32)
        if not input_is_bf16:
            # Exact hi/lo split: x = hi + lo with both parts bf16-representable
            # (up to a ~2^-18 relative residual), so the f32-accumulated result
            # is f32-quality irrespective of MXU contraction precision.
            x_lo = (xb.astype(jnp.float32) - x_hi.astype(jnp.float32))
            acc = acc + jnp.dot(w, x_lo.astype(jnp.bfloat16),
                                preferred_element_type=jnp.float32)
        o_ref[bi] = (acc * inv_k).astype(o_ref.dtype)


def moving_avg(x, kernel_size, stride):
    """Equivalent of moving_avg(kernel_size, stride).forward(x) for x:(B, L, C)."""
    B, L, C = x.shape
    assert L >= 2, "sequence length must be >= 2"
    pad = (kernel_size - 1) // 2
    L_pad = L + 2 * pad
    L_out = (L_pad - kernel_size) // stride + 1
    assert L_out >= 1, "kernel_size too large for the (padded) sequence"

    # ---- output-time tiling (single tile whenever it fits; else exact
    #      multiple-of-16 tiles, padding + final slice only as a fallback) ----
    T_CAP = 512
    if L_out <= T_CAP:
        t_out, num_t = L_out, 1
    else:
        t_out = 0
        for cand in range(T_CAP - T_CAP % 16, 15, -16):
            if L_out % cand == 0:
                t_out = cand
                break
        if t_out == 0:
            t_out = T_CAP - T_CAP % 16
        num_t = -(-L_out // t_out)
    l_out_grid = num_t * t_out

    # ---- batch tiling: largest divisor of B (<= 8, bounds the unrolled inner
    #      loop) whose blocks stay within a modest per-buffer VMEM budget ----
    in_bytes = jnp.dtype(x.dtype).itemsize
    budget = 2 * 1024 * 1024
    b_blk = 1
    for cand in range(min(B, 8), 0, -1):
        if (B % cand == 0
                and cand * L * C * in_bytes <= budget
                and cand * t_out * C * 4 <= budget):
            b_blk = cand
            break
    num_b = B // b_blk

    kern = functools.partial(
        _moving_avg_kernel,
        kernel_size=kernel_size, stride=stride, pad=pad, seq_len=L,
        t_blk=t_out)

    # Explicit VMEM budget (double-buffered I/O blocks + W scratch + headroom);
    # stays far under v7x's 64 MiB physical VMEM.
    est = (2 * b_blk * L * C * in_bytes            # double-buffered input
           + 2 * b_blk * t_out * C * in_bytes      # double-buffered output
           + t_out * L * 2                         # bf16 W scratch
           + 4 * b_blk * max(L, t_out) * C * 4)    # f32 compute temporaries
    vmem_limit = int(min(max(2 * est, 32 * 1024 * 1024), 48 * 1024 * 1024))

    out = pl.pallas_call(
        kern,
        out_shape=jax.ShapeDtypeStruct((B, l_out_grid, C), x.dtype),
        grid_spec=pltpu.PrefetchScalarGridSpec(
            num_scalar_prefetch=0,
            grid=(num_t, num_b),
            in_specs=[pl.BlockSpec((b_blk, L, C), lambda t, b: (b, 0, 0))],
            out_specs=pl.BlockSpec((b_blk, t_out, C), lambda t, b: (b, t, 0)),
            scratch_shapes=[pltpu.VMEM((t_out, L), jnp.bfloat16)],
        ),
        compiler_params=pltpu.CompilerParams(
            dimension_semantics=("parallel", "arbitrary"),
            vmem_limit_bytes=vmem_limit),
    )(x)

    if l_out_grid != L_out:
        out = out[:, :L_out, :]
    return out


def _reference_moving_avg(x, kernel_size, stride):
    """Pure-JAX reference mirroring the PyTorch forward (direct windowed sum)."""
    pad = (kernel_size - 1) // 2
    front = jnp.repeat(x[:, 0:1, :], pad, axis=1)
    end = jnp.repeat(x[:, -1:, :], pad, axis=1)
    xp = jnp.concatenate([front, x, end], axis=1).astype(jnp.float32)
    L_pad = xp.shape[1]
    L_out = (L_pad - kernel_size) // stride + 1
    acc = 0.0
    for k in range(kernel_size):
        acc = acc + xp[:, k: k + (L_out - 1) * stride + 1: stride, :]
    return acc / kernel_size


if __name__ == "__main__":
    key = jax.random.PRNGKey(0)
    configs = [
        # (B,  L,   C,  K, S, dtype,        tol)
        (2,   96,  7, 25, 1, jnp.float32,  1e-3),   # canonical DLinear (ETT, C=7)
        (16,  96,  8, 25, 1, jnp.float32,  1e-3),   # batch-tiled grid (num_b > 1)
        (4,  720, 16, 25, 1, jnp.float32,  1e-3),   # long seq -> 3 output-time tiles
        (2,   64, 32,  7, 3, jnp.float32,  1e-3),   # strided pooling
        (4,   96,  8, 25, 1, jnp.bfloat16, 1e-2),   # bf16 I/O, f32 accumulation
    ]
    for i, (B, L, C, K, S, dt, tol) in enumerate(configs):
        k = jax.random.fold_in(key, i)
        x = jax.random.normal(k, (B, L, C), dtype=jnp.float32).astype(dt)
        out = jax.block_until_ready(moving_avg(x, K, S))
        ref = _reference_moving_avg(x, K, S)
        assert out.shape == ref.shape, (i, out.shape, ref.shape)
        err = float(jnp.max(jnp.abs(out.astype(jnp.float32) - ref)))
        assert err <= tol, (i, err)
    print("KERNEL_OK")
</pallas_src>

<mosaic_0001>
module attributes {stable_mosaic.version = 11 : i64} {
  func.func @_moving_avg_kernel(%arg0: i32, %arg1: i32, %arg2: memref<2x96x7xf32, #tpu.memory_space<vmem>>, %arg3: memref<2x96x7xf32, #tpu.memory_space<vmem>>, %arg4: memref<96x96xbf16, #tpu.memory_space<vmem>>) attributes {dimension_semantics = [#tpu.dimension_semantics<parallel>, #tpu.dimension_semantics<arbitrary>], iteration_bounds = array<i64: 1, 1>, scalar_prefetch = 0 : i64, scratch_operands = 1 : i64, tpu.core_type = #tpu.core_type<tc>, window_params = [{transform_indices = @transform_0, window_bounds = array<i64: 2, 96, 7>}, {transform_indices = @transform_1, window_bounds = array<i64: 2, 96, 7>}]} {
    %c0_i32 = arith.constant 0 : i32
    %0 = arith.cmpi eq, %arg1, %c0_i32 : i32
    %1 = arith.extui %0 : i1 to i32
    %c0_i32_0 = arith.constant 0 : i32
    %2 = arith.cmpi ne, %1, %c0_i32_0 : i32
    scf.if %2 {
      %32 = tpu.iota {dimensions = array<i32: 0>} : vector<96x1xi32>
      %c96_i32 = arith.constant 96 : i32
      %33 = arith.muli %arg0, %c96_i32 : i32
      %34 = vector.broadcast %33 : i32 to vector<96x1xi32>
      %35 = arith.addi %32, %34 : vector<96x1xi32>
      %36 = tpu.iota {dimensions = array<i32: 1>} : vector<96x96xi32>
      %c1_i32 = arith.constant 1 : i32
      %37 = vector.broadcast %c1_i32 : i32 to vector<96x1xi32>
      %38 = arith.muli %35, %37 : vector<96x1xi32>
      %c12_i32 = arith.constant 12 : i32
      %39 = vector.broadcast %c12_i32 : i32 to vector<96x1xi32>
      %40 = arith.subi %38, %39 : vector<96x1xi32>
      %c12_i32_18 = arith.constant 12 : i32
      %41 = vector.broadcast %c12_i32_18 : i32 to vector<96x1xi32>
      %42 = arith.addi %38, %41 : vector<96x1xi32>
      %43 = vector.broadcast %40 : vector<96x1xi32> to vector<96x96xi32>
      %44 = arith.cmpi sge, %36, %43 : vector<96x96xi32>
      %45 = vector.broadcast %42 : vector<96x1xi32> to vector<96x96xi32>
      %46 = arith.cmpi sle, %36, %45 : vector<96x96xi32>
      %47 = arith.andi %44, %46 : vector<96x96xi1>
      %c13_i32 = arith.constant 13 : i32
      %48 = vector.broadcast %c13_i32 : i32 to vector<96x1xi32>
      %49 = arith.subi %48, %38 : vector<96x1xi32>
      %c0_i32_19 = arith.constant 0 : i32
      %c25_i32 = arith.constant 25 : i32
      %50 = vector.broadcast %c0_i32_19 : i32 to vector<96x1xi32>
      %51 = arith.maxsi %50, %49 : vector<96x1xi32>
      %52 = vector.broadcast %c25_i32 : i32 to vector<96x1xi32>
      %53 = arith.minsi %52, %51 : vector<96x1xi32>
      %54 = arith.sitofp %53 : vector<96x1xi32> to vector<96x1xf32>
      %c25_i32_20 = arith.constant 25 : i32
      %55 = vector.broadcast %c25_i32_20 : i32 to vector<96x1xi32>
      %56 = arith.addi %38, %55 : vector<96x1xi32>
      %c107_i32 = arith.constant 107 : i32
      %57 = vector.broadcast %c107_i32 : i32 to vector<96x1xi32>
      %58 = arith.subi %56, %57 : vector<96x1xi32>
      %c0_i32_21 = arith.constant 0 : i32
      %c25_i32_22 = arith.constant 25 : i32
      %59 = vector.broadcast %c0_i32_21 : i32 to vector<96x1xi32>
      %60 = arith.maxsi %59, %58 : vector<96x1xi32>
      %61 = vector.broadcast %c25_i32_22 : i32 to vector<96x1xi32>
      %62 = arith.minsi %61, %60 : vector<96x1xi32>
      %63 = arith.sitofp %62 : vector<96x1xi32> to vector<96x1xf32>
      %c0_i32_23 = arith.constant 0 : i32
      %64 = vector.broadcast %c0_i32_23 : i32 to vector<96x96xi32>
      %65 = arith.cmpi eq, %36, %64 : vector<96x96xi32>
      %c95_i32 = arith.constant 95 : i32
      %66 = vector.broadcast %c95_i32 : i32 to vector<96x96xi32>
      %67 = arith.cmpi eq, %36, %66 : vector<96x96xi32>
      %68 = arith.extui %47 : vector<96x96xi1> to vector<96x96xi32>
      %69 = arith.sitofp %68 : vector<96x96xi32> to vector<96x96xf32>
      %70 = vector.shape_cast %63 : vector<96x1xf32> to vector<96x1xf32>
      %71 = vector.broadcast %70 : vector<96x1xf32> to vector<96x96xf32>
      %72 = arith.select %67, %71, %69 : vector<96x96xi1>, vector<96x96xf32>
      %73 = vector.shape_cast %54 : vector<96x1xf32> to vector<96x1xf32>
      %74 = vector.broadcast %73 : vector<96x1xf32> to vector<96x96xf32>
      %75 = arith.select %65, %74, %72 : vector<96x96xi1>, vector<96x96xf32>
      %76 = arith.truncf %75 : vector<96x96xf32> to vector<96x96xbf16>
      %c0_24 = arith.constant 0 : index
      %c0_25 = arith.constant 0 : index
      %77 = vector.load %arg4[%c0_24, %c0_25] : memref<96x96xbf16, #tpu.memory_space<vmem>>, vector<96x96xbf16>
      tpu.vector_store %arg4[%c0_24, %c0_25], %76 {strides = array<i32>} : memref<96x96xbf16, #tpu.memory_space<vmem>>, vector<96x96xbf16>,
    } else {
    }
    %c0 = arith.constant 0 : index
    %c0_1 = arith.constant 0 : index
    %3 = vector.load %arg4[%c0, %c0_1] : memref<96x96xbf16, #tpu.memory_space<vmem>>, vector<96x96xbf16>
    %c0_2 = arith.constant 0 : index
    %c0_3 = arith.constant 0 : index
    %c0_4 = arith.constant 0 : index
    %4 = vector.load %arg2[%c0_2, %c0_3, %c0_4] : memref<2x96x7xf32, #tpu.memory_space<vmem>>, vector<1x96x7xf32>
    %5 = vector.shape_cast %4 : vector<1x96x7xf32> to vector<96x7xf32>
    %6 = arith.truncf %5 : vector<96x7xf32> to vector<96x7xbf16>
    %cst = arith.constant dense<0.000000e+00> : vector<96x7xf32>
    %7 = tpu.matmul %3, %6, %cst {dimension_numbers = #tpu.dot_dimension_numbers<[1], [0], [0], [1], [0, 0, 1, 1], [], []>} : vector<96x96xbf16>, vector<96x7xbf16>, vector<96x7xf32> -> vector<96x7xf32>
    %8 = arith.extf %6 : vector<96x7xbf16> to vector<96x7xf32>
    %9 = arith.subf %5, %8 : vector<96x7xf32>
    %10 = arith.truncf %9 : vector<96x7xf32> to vector<96x7xbf16>
    %cst_5 = arith.constant dense<0.000000e+00> : vector<96x7xf32>
    %11 = tpu.matmul %3, %10, %cst_5 {dimension_numbers = #tpu.dot_dimension_numbers<[1], [0], [0], [1], [0, 0, 1, 1], [], []>} : vector<96x96xbf16>, vector<96x7xbf16>, vector<96x7xf32> -> vector<96x7xf32>
    %12 = arith.addf %7, %11 : vector<96x7xf32>
    %cst_6 = arith.constant 4.000000e-02 : f32
    %13 = vector.broadcast %cst_6 : f32 to vector<96x7xf32>
    %14 = arith.mulf %12, %13 : vector<96x7xf32>
    %c0_7 = arith.constant 0 : index
    %c0_8 = arith.constant 0 : index
    %c0_9 = arith.constant 0 : index
    %15 = vector.load %arg3[%c0_7, %c0_8, %c0_9] : memref<2x96x7xf32, #tpu.memory_space<vmem>>, vector<1x96x7xf32>
    %16 = vector.shape_cast %15 : vector<1x96x7xf32> to vector<96x7xf32>
    %17 = vector.shape_cast %14 : vector<96x7xf32> to vector<1x96x7xf32>
    tpu.vector_store %arg3[%c0_7, %c0_8, %c0_9], %17 {strides = array<i32>} : memref<2x96x7xf32, #tpu.memory_space<vmem>>, vector<1x96x7xf32>,
    %c1 = arith.constant 1 : index
    %c0_10 = arith.constant 0 : index
    %c0_11 = arith.constant 0 : index
    %18 = vector.load %arg2[%c1, %c0_10, %c0_11] : memref<2x96x7xf32, #tpu.memory_space<vmem>>, vector<1x96x7xf32>
    %19 = vector.shape_cast %18 : vector<1x96x7xf32> to vector<96x7xf32>
    %20 = arith.truncf %19 : vector<96x7xf32> to vector<96x7xbf16>
    %cst_12 = arith.constant dense<0.000000e+00> : vector<96x7xf32>
    %21 = tpu.matmul %3, %20, %cst_12 {dimension_numbers = #tpu.dot_dimension_numbers<[1], [0], [0], [1], [0, 0, 1, 1], [], []>} : vector<96x96xbf16>, vector<96x7xbf16>, vector<96x7xf32> -> vector<96x7xf32>
    %22 = arith.extf %20 : vector<96x7xbf16> to vector<96x7xf32>
    %23 = arith.subf %19, %22 : vector<96x7xf32>
    %24 = arith.truncf %23 : vector<96x7xf32> to vector<96x7xbf16>
    %cst_13 = arith.constant dense<0.000000e+00> : vector<96x7xf32>
    %25 = tpu.matmul %3, %24, %cst_13 {dimension_numbers = #tpu.dot_dimension_numbers<[1], [0], [0], [1], [0, 0, 1, 1], [], []>} : vector<96x96xbf16>, vector<96x7xbf16>, vector<96x7xf32> -> vector<96x7xf32>
    %26 = arith.addf %21, %25 : vector<96x7xf32>
    %cst_14 = arith.constant 4.000000e-02 : f32
    %27 = vector.broadcast %cst_14 : f32 to vector<96x7xf32>
    %28 = arith.mulf %26, %27 : vector<96x7xf32>
    %c1_15 = arith.constant 1 : index
    %c0_16 = arith.constant 0 : index
    %c0_17 = arith.constant 0 : index
    %29 = vector.load %arg3[%c1_15, %c0_16, %c0_17] : memref<2x96x7xf32, #tpu.memory_space<vmem>>, vector<1x96x7xf32>
    %30 = vector.shape_cast %29 : vector<1x96x7xf32> to vector<96x7xf32>
    %31 = vector.shape_cast %28 : vector<96x7xf32> to vector<1x96x7xf32>
    tpu.vector_store %arg3[%c1_15, %c0_16, %c0_17], %31 {strides = array<i32>} : memref<2x96x7xf32, #tpu.memory_space<vmem>>, vector<1x96x7xf32>,
    return
  }
  func.func @transform_0(%arg0: i32, %arg1: i32) -> (i32, i32, i32) {
    %c0_i32 = arith.constant 0 : i32
    %c0_i32_0 = arith.constant 0 : i32
    %c0_i32_1 = arith.constant 0 : i32
    return %arg1, %c0_i32, %c0_i32_0 : i32, i32, i32
  }
  func.func @transform_1(%arg0: i32, %arg1: i32) -> (i32, i32, i32) {
    %c0_i32 = arith.constant 0 : i32
    %c0_i32_0 = arith.constant 0 : i32
    return %arg1, %arg0, %c0_i32 : i32, i32, i32
  }
}

</mosaic_0001>

<llo_original>
// kernel: tpu_custom_call.1
$region0: #{tpu_custom_call.1}
  #allocation0 [shape = 'u32[]', space=smem, size = 0x4, offset = 0x4, fixed_abs, tag = 'smem constant byte address 0x4 - core index']
  #allocation1 [shape = 'u32[144,128]{1,0:T(1,128)}', space=vmem, size = 0x12000, scoped, tag = 'internal scratch']
  #allocation2 [shape = 'bf16[96,96]{1,0:T(16,128)(2,1)}', space=vmem, size = 0x6000, scoped, tag = 'scratch operand']
  %s0 = inlined_call_operand.vmem [shape: f32[2,96,7], index: 0, kind: input, shape index: {}]
  %s1 = inlined_call_operand.vmem [shape: f32[2,96,7], index: 1, kind: output, shape index: {}]
  %s2 = sld [smem:[#allocation0]]
  $region18: #{tpu_custom_call.1} parent=0
    _
  %s4 = ssub.s32 1, %s2
  %s5 = scalar_select 0, %s4, %s2
  // Predicated region
  $region2: #{tpu_custom_call.1} parent=0 // pred_check
    _
  $region3: #{tpu_custom_call.1} parent=0 // pred_check_branch
    %7 = sbr.rel (0) target = $region5
  $region4: #{tpu_custom_call.1} parent=0 // pred_region
    _
  $region5: #{tpu_custom_call.1} parent=0 // pred_fallthru
    _
  %p9 = scmp.eq.s32.totalorder 0, 0
  // Predicated region
  $region6: #{tpu_custom_call.1} parent=0 // pred_check
    %p10 = pneg %p9
  $region7: #{tpu_custom_call.1} parent=0 // pred_check_branch
    %12 = sbr.rel (%p10) target = $region9
  $region8: #{tpu_custom_call.1} parent=0 // pred_region
    %v13 = vlaneseq
    %v14 = vshrl.u32 %v13, 7
    %v15 = vadd.s32 %v14, 8
    %v16 = vadd.s32 %v14, 16
    %v17 = vadd.s32 %v14, 24
    %v18 = vadd.s32 %v14, 32
    %v19 = vadd.s32 %v14, 40
    %v20 = vadd.s32 %v14, 48
    %v21 = vadd.s32 %v14, 56
    %v22 = vadd.s32 %v14, 64
    %v23 = vadd.s32 %v14, 72
    %v24 = vadd.s32 %v14, 80
    %v25 = vadd.s32 %v14, 88
    %s26 = smul.u32 0, 96
    %v27 = vstv %s26
    %v28 = vadd.s32 %v14, %v27
    %v29 = vadd.s32 %v15, %v27
    %v30 = vadd.s32 %v16, %v27
    %v31 = vadd.s32 %v17, %v27
    %v32 = vadd.s32 %v18, %v27
    %v33 = vadd.s32 %v19, %v27
    %v34 = vadd.s32 %v20, %v27
    %v35 = vadd.s32 %v21, %v27
    %v36 = vadd.s32 %v22, %v27
    %v37 = vadd.s32 %v23, %v27
    %v38 = vadd.s32 %v24, %v27
    %v39 = vadd.s32 %v25, %v27
    %v40 = vlaneseq
    %v41 = vand.u32 %v40, 127
    %v42 = vsub.s32 %v28, 12
    %v43 = vsub.s32 %v29, 12
    %v44 = vsub.s32 %v30, 12
    %v45 = vsub.s32 %v31, 12
    %v46 = vsub.s32 %v32, 12
    %v47 = vsub.s32 %v33, 12
    %v48 = vsub.s32 %v34, 12
    %v49 = vsub.s32 %v35, 12
    %v50 = vsub.s32 %v36, 12
    %v51 = vsub.s32 %v37, 12
    %v52 = vsub.s32 %v38, 12
    %v53 = vsub.s32 %v39, 12
    %v54 = vadd.s32 %v28, 12
    %v55 = vadd.s32 %v29, 12
    %v56 = vadd.s32 %v30, 12
    %v57 = vadd.s32 %v31, 12
    %v58 = vadd.s32 %v32, 12
    %v59 = vadd.s32 %v33, 12
    %v60 = vadd.s32 %v34, 12
    %v61 = vadd.s32 %v35, 12
    %v62 = vadd.s32 %v36, 12
    %v63 = vadd.s32 %v37, 12
    %v64 = vadd.s32 %v38, 12
    %v65 = vadd.s32 %v39, 12
    %vm66 = vcmp.ge.s32.totalorder %v41, %v42
    %vm67 = vcmp.ge.s32.totalorder %v41, %v43
    %vm68 = vcmp.ge.s32.totalorder %v41, %v44
    %vm69 = vcmp.ge.s32.totalorder %v41, %v45
    %vm70 = vcmp.ge.s32.totalorder %v41, %v46
    %vm71 = vcmp.ge.s32.totalorder %v41, %v47
    %vm72 = vcmp.ge.s32.totalorder %v41, %v48
    %vm73 = vcmp.ge.s32.totalorder %v41, %v49
    %vm74 = vcmp.ge.s32.totalorder %v41, %v50
    %vm75 = vcmp.ge.s32.totalorder %v41, %v51
    %vm76 = vcmp.ge.s32.totalorder %v41, %v52
    %vm77 = vcmp.ge.s32.totalorder %v41, %v53
    %vm78 = vcmp.le.s32.totalorder %v41, %v54
    %vm79 = vcmp.le.s32.totalorder %v41, %v55
    %vm80 = vcmp.le.s32.totalorder %v41, %v56
    %vm81 = vcmp.le.s32.totalorder %v41, %v57
    %vm82 = vcmp.le.s32.totalorder %v41, %v58
    %vm83 = vcmp.le.s32.totalorder %v41, %v59
    %vm84 = vcmp.le.s32.totalorder %v41, %v60
    %vm85 = vcmp.le.s32.totalorder %v41, %v61
    %vm86 = vcmp.le.s32.totalorder %v41, %v62
    %vm87 = vcmp.le.s32.totalorder %v41, %v63
    %vm88 = vcmp.le.s32.totalorder %v41, %v64
    %vm89 = vcmp.le.s32.totalorder %v41, %v65
    %vm90 = vmand %vm66, %vm78
    %vm91 = vmand %vm67, %vm79
    %vm92 = vmand %vm68, %vm80
    %vm93 = vmand %vm69, %vm81
    %vm94 = vmand %vm70, %vm82
    %vm95 = vmand %vm71, %vm83
    %vm96 = vmand %vm72, %vm84
    %vm97 = vmand %vm73, %vm85
    %vm98 = vmand %vm74, %vm86
    %vm99 = vmand %vm75, %vm87
    %vm100 = vmand %vm76, %vm88
    %vm101 = vmand %vm77, %vm89
    %v102 = vsub.s32 13, %v28
    %v103 = vsub.s32 13, %v29
    %v104 = vsub.s32 13, %v30
    %v105 = vsub.s32 13, %v31
    %v106 = vsub.s32 13, %v32
    %v107 = vsub.s32 13, %v33
    %v108 = vsub.s32 13, %v34
    %v109 = vsub.s32 13, %v35
    %v110 = vsub.s32 13, %v36
    %v111 = vsub.s32 13, %v37
    %v112 = vsub.s32 13, %v38
    %v113 = vsub.s32 13, %v39
    %vm114 = vcmp.gt.s32.totalorder %v102, 0
    %v115 = vsel %vm114, %v102, 0
    %vm116 = vcmp.gt.s32.totalorder %v103, 0
    %v117 = vsel %vm116, %v103, 0
    %vm118 = vcmp.gt.s32.totalorder %v104, 0
    %v119 = vsel %vm118, %v104, 0
    %vm120 = vcmp.gt.s32.totalorder %v105, 0
    %v121 = vsel %vm120, %v105, 0
    %vm122 = vcmp.gt.s32.totalorder %v106, 0
    %v123 = vsel %vm122, %v106, 0
    %vm124 = vcmp.gt.s32.totalorder %v107, 0
    %v125 = vsel %vm124, %v107, 0
    %vm126 = vcmp.gt.s32.totalorder %v108, 0
    %v127 = vsel %vm126, %v108, 0
    %vm128 = vcmp.gt.s32.totalorder %v109, 0
    %v129 = vsel %vm128, %v109, 0
    %vm130 = vcmp.gt.s32.totalorder %v110, 0
    %v131 = vsel %vm130, %v110, 0
    %vm132 = vcmp.gt.s32.totalorder %v111, 0
    %v133 = vsel %vm132, %v111, 0
    %vm134 = vcmp.gt.s32.totalorder %v112, 0
    %v135 = vsel %vm134, %v112, 0
    %vm136 = vcmp.gt.s32.totalorder %v113, 0
    %v137 = vsel %vm136, %v113, 0
    %vm138 = vcmp.lt.s32.totalorder %v115, 25
    %v139 = vsel %vm138, %v115, 25
    %vm140 = vcmp.lt.s32.totalorder %v117, 25
    %v141 = vsel %vm140, %v117, 25
    %vm142 = vcmp.lt.s32.totalorder %v119, 25
    %v143 = vsel %vm142, %v119, 25
    %vm144 = vcmp.lt.s32.totalorder %v121, 25
    %v145 = vsel %vm144, %v121, 25
    %vm146 = vcmp.lt.s32.totalorder %v123, 25
    %v147 = vsel %vm146, %v123, 25
    %vm148 = vcmp.lt.s32.totalorder %v125, 25
    %v149 = vsel %vm148, %v125, 25
    %vm150 = vcmp.lt.s32.totalorder %v127, 25
    %v151 = vsel %vm150, %v127, 25
    %vm152 = vcmp.lt.s32.totalorder %v129, 25
    %v153 = vsel %vm152, %v129, 25
    %vm154 = vcmp.lt.s32.totalorder %v131, 25
    %v155 = vsel %vm154, %v131, 25
    %vm156 = vcmp.lt.s32.totalorder %v133, 25
    %v157 = vsel %vm156, %v133, 25
    %vm158 = vcmp.lt.s32.totalorder %v135, 25
    %v159 = vsel %vm158, %v135, 25
    %vm160 = vcmp.lt.s32.totalorder %v137, 25
    %v161 = vsel %vm160, %v137, 25
    %v162 = vcvt.s32.f32 %v139
    %v163 = vcvt.s32.f32 %v141
    %v164 = vcvt.s32.f32 %v143
    %v165 = vcvt.s32.f32 %v145
    %v166 = vcvt.s32.f32 %v147
    %v167 = vcvt.s32.f32 %v149
    %v168 = vcvt.s32.f32 %v151
    %v169 = vcvt.s32.f32 %v153
    %v170 = vcvt.s32.f32 %v155
    %v171 = vcvt.s32.f32 %v157
    %v172 = vcvt.s32.f32 %v159
    %v173 = vcvt.s32.f32 %v161
    %v174 = vadd.s32 %v28, 25
    %v175 = vadd.s32 %v29, 25
    %v176 = vadd.s32 %v30, 25
    %v177 = vadd.s32 %v31, 25
    %v178 = vadd.s32 %v32, 25
    %v179 = vadd.s32 %v33, 25
    %v180 = vadd.s32 %v34, 25
    %v181 = vadd.s32 %v35, 25
    %v182 = vadd.s32 %v36, 25
    %v183 = vadd.s32 %v37, 25
    %v184 = vadd.s32 %v38, 25
    %v185 = vadd.s32 %v39, 25
    %v186 = vsub.s32 %v174, 107
    %v187 = vsub.s32 %v175, 107
    %v188 = vsub.s32 %v176, 107
    %v189 = vsub.s32 %v177, 107
    %v190 = vsub.s32 %v178, 107
    %v191 = vsub.s32 %v179, 107
    %v192 = vsub.s32 %v180, 107
    %v193 = vsub.s32 %v181, 107
    %v194 = vsub.s32 %v182, 107
    %v195 = vsub.s32 %v183, 107
    %v196 = vsub.s32 %v184, 107
    %v197 = vsub.s32 %v185, 107
    %vm198 = vcmp.gt.s32.totalorder %v186, 0
    %v199 = vsel %vm198, %v186, 0
    %vm200 = vcmp.gt.s32.totalorder %v187, 0
    %v201 = vsel %vm200, %v187, 0
    %vm202 = vcmp.gt.s32.totalorder %v188, 0
    %v203 = vsel %vm202, %v188, 0
    %vm204 = vcmp.gt.s32.totalorder %v189, 0
    %v205 = vsel %vm204, %v189, 0
    %vm206 = vcmp.gt.s32.totalorder %v190, 0
    %v207 = vsel %vm206, %v190, 0
    %vm208 = vcmp.gt.s32.totalorder %v191, 0
    %v209 = vsel %vm208, %v191, 0
    %vm210 = vcmp.gt.s32.totalorder %v192, 0
    %v211 = vsel %vm210, %v192, 0
    %vm212 = vcmp.gt.s32.totalorder %v193, 0
    %v213 = vsel %vm212, %v193, 0
    %vm214 = vcmp.gt.s32.totalorder %v194, 0
    %v215 = vsel %vm214, %v194, 0
    %vm216 = vcmp.gt.s32.totalorder %v195, 0
    %v217 = vsel %vm216, %v195, 0
    %vm218 = vcmp.gt.s32.totalorder %v196, 0
    %v219 = vsel %vm218, %v196, 0
    %vm220 = vcmp.gt.s32.totalorder %v197, 0
    %v221 = vsel %vm220, %v197, 0
    %vm222 = vcmp.lt.s32.totalorder %v199, 25
    %v223 = vsel %vm222, %v199, 25
    %vm224 = vcmp.lt.s32.totalorder %v201, 25
    %v225 = vsel %vm224, %v201, 25
    %vm226 = vcmp.lt.s32.totalorder %v203, 25
    %v227 = vsel %vm226, %v203, 25
    %vm228 = vcmp.lt.s32.totalorder %v205, 25
    %v229 = vsel %vm228, %v205, 25
    %vm230 = vcmp.lt.s32.totalorder %v207, 25
    %v231 = vsel %vm230, %v207, 25
    %vm232 = vcmp.lt.s32.totalorder %v209, 25
    %v233 = vsel %vm232, %v209, 25
    %vm234 = vcmp.lt.s32.totalorder %v211, 25
    %v235 = vsel %vm234, %v211, 25
    %vm236 = vcmp.lt.s32.totalorder %v213, 25
    %v237 = vsel %vm236, %v213, 25
    %vm238 = vcmp.lt.s32.totalorder %v215, 25
    %v239 = vsel %vm238, %v215, 25
    %vm240 = vcmp.lt.s32.totalorder %v217, 25
    %v241 = vsel %vm240, %v217, 25
    %vm242 = vcmp.lt.s32.totalorder %v219, 25
    %v243 = vsel %vm242, %v219, 25
    %vm244 = vcmp.lt.s32.totalorder %v221, 25
    %v245 = vsel %vm244, %v221, 25
    %v246 = vcvt.s32.f32 %v223
    %v247 = vcvt.s32.f32 %v225
    %v248 = vcvt.s32.f32 %v227
    %v249 = vcvt.s32.f32 %v229
    %v250 = vcvt.s32.f32 %v231
    %v251 = vcvt.s32.f32 %v233
    %v252 = vcvt.s32.f32 %v235
    %v253 = vcvt.s32.f32 %v237
    %v254 = vcvt.s32.f32 %v239
    %v255 = vcvt.s32.f32 %v241
    %v256 = vcvt.s32.f32 %v243
    %v257 = vcvt.s32.f32 %v245
    %vm258 = vcmp.eq.s32.totalorder %v41, 0
    %vm259 = vcmp.eq.s32.totalorder %v41, 95
    %v260 = vsel %vm90, 1, 0
    %v261 = vsel %vm91, 1, 0
    %v262 = vsel %vm92, 1, 0
    %v263 = vsel %vm93, 1, 0
    %v264 = vsel %vm94, 1, 0
    %v265 = vsel %vm95, 1, 0
    %v266 = vsel %vm96, 1, 0
    %v267 = vsel %vm97, 1, 0
    %v268 = vsel %vm98, 1, 0
    %v269 = vsel %vm99, 1, 0
    %v270 = vsel %vm100, 1, 0
    %v271 = vsel %vm101, 1, 0
    %v272 = vcvt.s32.f32 %v260
    %v273 = vcvt.s32.f32 %v261
    %v274 = vcvt.s32.f32 %v262
    %v275 = vcvt.s32.f32 %v263
    %v276 = vcvt.s32.f32 %v264
    %v277 = vcvt.s32.f32 %v265
    %v278 = vcvt.s32.f32 %v266
    %v279 = vcvt.s32.f32 %v267
    %v280 = vcvt.s32.f32 %v268
    %v281 = vcvt.s32.f32 %v269
    %v282 = vcvt.s32.f32 %v270
    %v283 = vcvt.s32.f32 %v271
    %v284 = vsel %vm259, %v246, %v272
    %v285 = vsel %vm259, %v247, %v273
    %v286 = vsel %vm259, %v248, %v274
    %v287 = vsel %vm259, %v249, %v275
    %v288 = vsel %vm259, %v250, %v276
    %v289 = vsel %vm259, %v251, %v277
    %v290 = vsel %vm259, %v252, %v278
    %v291 = vsel %vm259, %v253, %v279
    %v292 = vsel %vm259, %v254, %v280
    %v293 = vsel %vm259, %v255, %v281
    %v294 = vsel %vm259, %v256, %v282
    %v295 = vsel %vm259, %v257, %v283
    %v296 = vsel %vm258, %v162, %v284
    %v297 = vsel %vm258, %v163, %v285
    %v298 = vsel %vm258, %v164, %v286
    %v299 = vsel %vm258, %v165, %v287
    %v300 = vsel %vm258, %v166, %v288
    %v301 = vsel %vm258, %v167, %v289
    %v302 = vsel %vm258, %v168, %v290
    %v303 = vsel %vm258, %v169, %v291
    %v304 = vsel %vm258, %v170, %v292
    %v305 = vsel %vm258, %v171, %v293
    %v306 = vsel %vm258, %v172, %v294
    %v307 = vsel %vm258, %v173, %v295
    %v308 = vpack.c.bf16 %v297, %v296
    %v309 = vpack.c.bf16 %v299, %v298
    %v310 = vpack.c.bf16 %v301, %v300
    %v311 = vpack.c.bf16 %v303, %v302
    %v312 = vpack.c.bf16 %v305, %v304
    %v313 = vpack.c.bf16 %v307, %v306
    %vm314 = vcmask 785408
    %315 = vst.msk [vmem:[#allocation2] sm:$0xff] %vm314, %v308
    %316 = vst.msk [vmem:[#allocation2 + $0x8] sm:$0xff] %vm314, %v309
    %317 = vst.msk [vmem:[#allocation2 + $0x10] sm:$0xff] %vm314, %v310
    %318 = vst.msk [vmem:[#allocation2 + $0x18] sm:$0xff] %vm314, %v311
    %319 = vst.msk [vmem:[#allocation2 + $0x20] sm:$0xff] %vm314, %v312
    %320 = vst.msk [vmem:[#allocation2 + $0x28] sm:$0xff] %vm314, %v313
  $region9: #{tpu_custom_call.1} parent=0 // pred_fallthru
    _
  %v321 = vld [vmem:[#allocation2] sm:$0xff]
  %v322 = vld [vmem:[#allocation2 + $0x8] sm:$0xff]
  %v323 = vld [vmem:[#allocation2 + $0x10] sm:$0xff]
  %v324 = vld [vmem:[#allocation2 + $0x18] sm:$0xff]
  %v325 = vld [vmem:[#allocation2 + $0x20] sm:$0xff]
  %v326 = vld [vmem:[#allocation2 + $0x28] sm:$0xff]
  %v327 = vld [vmem:[%s0] sm:$0xff]
  %v328 = vld [vmem:[%s0 + $0x8] sm:$0xff]
  %v329 = vld [vmem:[%s0 + $0x10] sm:$0xff]
  %v330 = vld [vmem:[%s0 + $0x18] sm:$0xff]
  %v331 = vld [vmem:[%s0 + $0x20] sm:$0xff]
  %v332 = vld [vmem:[%s0 + $0x28] sm:$0xff]
  %v333 = vld [vmem:[%s0 + $0x30] sm:$0xff]
  %v334 = vld [vmem:[%s0 + $0x38] sm:$0xff]
  %v335 = vld [vmem:[%s0 + $0x40] sm:$0xff]
  %v336 = vld [vmem:[%s0 + $0x48] sm:$0xff]
  %v337 = vld [vmem:[%s0 + $0x50] sm:$0xff]
  %v338 = vld [vmem:[%s0 + $0x58] sm:$0xff]
  %v339 = vpack.c.bf16 %v328, %v327
  %v340 = vpack.c.bf16 %v330, %v329
  %v341 = vpack.c.bf16 %v332, %v331
  %v342 = vpack.c.bf16 %v334, %v333
  %v343 = vpack.c.bf16 %v336, %v335
  %v344 = vpack.c.bf16 %v338, %v337
  %v345 = vunpack.c.l.bf16 %v339
  %v346 = vunpack.c.h.bf16 %v339
  %v347 = vunpack.c.l.bf16 %v340
  %v348 = vunpack.c.h.bf16 %v340
  %v349 = vunpack.c.l.bf16 %v341
  %v350 = vunpack.c.h.bf16 %v341
  %v351 = vunpack.c.l.bf16 %v342
  %v352 = vunpack.c.h.bf16 %v342
  %v353 = vunpack.c.l.bf16 %v343
  %v354 = vunpack.c.h.bf16 %v343
  %v355 = vunpack.c.l.bf16 %v344
  %v356 = vunpack.c.h.bf16 %v344
  %v357 = vsub.f32 %v327, %v345
  %v358 = vsub.f32 %v328, %v346
  %v359 = vsub.f32 %v329, %v347
  %v360 = vsub.f32 %v330, %v348
  %v361 = vsub.f32 %v331, %v349
  %v362 = vsub.f32 %v332, %v350
  %v363 = vsub.f32 %v333, %v351
  %v364 = vsub.f32 %v334, %v352
  %v365 = vsub.f32 %v335, %v353
  %v366 = vsub.f32 %v336, %v354
  %v367 = vsub.f32 %v337, %v355
  %v368 = vsub.f32 %v338, %v356
  %v369 = vpack.c.bf16 %v358, %v357
  %v370 = vpack.c.bf16 %v360, %v359
  %v371 = vpack.c.bf16 %v362, %v361
  %v372 = vpack.c.bf16 %v364, %v363
  %v373 = vpack.c.bf16 %v366, %v365
  %v374 = vpack.c.bf16 %v368, %v367
  %vm375 = vcmask 785408
  %v377 = vsel %vm375, %v321, 0
  %v380 = vsel %vm375, %v322, 0
  %v383 = vsel %vm375, %v323, 0
  %v386 = vsel %vm375, %v324, 0
  %v389 = vsel %vm375, %v325, 0
  %v392 = vsel %vm375, %v326, 0
  %394 = vmatprep.subr.bf16.mxu0 0
  %395 = vmatpush1.bf16.msra.mxu0 %v369
  %396 = vmatprep.subr.bf16.mxu0 0
  %397 = vmatpush1.bf16.msra.mxu0 %v370
  %398 = vmatprep.subr.bf16.mxu0 0
  %399 = vmatpush1.bf16.msra.mxu0 %v371
  %400 = vmatprep.subr.bf16.mxu0 0
  %401 = vmatpush1.bf16.msra.mxu0 %v372
  %402 = vmatprep.subr.bf16.mxu0 0
  %403 = vmatpush1.bf16.msra.mxu0 %v373
  %404 = vmatprep.subr.bf16.mxu0 0
  %405 = vmatpush1.bf16.msra.mxu0 %v374
  %406 = vmatprep.subr.bf16.mxu0 0
  %407 = vmatpush1.bf16.msra.mxu0 0
  %408 = vmatprep.subr.bf16.mxu0 0
  %409 = vmatpush1.bf16.msra.mxu0 0
  %410 = vmatprep.subr.bf16.mxu0 0
  %411 = vmatpush1.bf16.msra.mxu0 0
  %412 = vmatprep.subr.bf16.mxu0 0
  %413 = vmatpush1.bf16.msra.mxu0 0
  %414 = vmatprep.subr.bf16.mxu0 0
  %415 = vmatpush1.bf16.msra.mxu0 0
  %416 = vmatprep.subr.bf16.mxu0 0
  %417 = vmatpush1.bf16.msra.mxu0 0
  %418 = vmatprep.subr.bf16.mxu0 0
  %419 = vmatpush1.bf16.msra.mxu0 0
  %420 = vmatprep.subr.bf16.mxu0 0
  %421 = vmatpush1.bf16.msra.mxu0 0
  %422 = vmatprep.subr.bf16.mxu0 0
  %423 = vmatpush1.bf16.msra.mxu0 0
  %424 = vmatprep.subr.bf16.mxu0 0
  %425 = vmatpush1.bf16.msra.mxu0 0
  %426 = vmatprep.mubr.bf16.mxu0 0
  %427 = vmatmul.mubr.bf16.gmra.mrb[0].mxu0 %v377
  %v428 = vpop.f32.mrb[0].mxu0
  %v429 = vadd.f32 0.0, %v428
  %v430 = vpop.f32.mrb[0].mxu0
  %v431 = vpop.f32.mrb[0].mxu0
  %v432 = vadd.f32 0.0, %v431
  %v433 = vpop.f32.mrb[0].mxu0
  %434 = vmatprep.mubr.bf16.mxu0 0
  %435 = vmatmul.mubr.bf16.gmra.mrb[0].mxu0 %v380
  %v436 = vpop.f32.mrb[0].mxu0
  %v437 = vadd.f32 0.0, %v436
  %v438 = vpop.f32.mrb[0].mxu0
  %v439 = vpop.f32.mrb[0].mxu0
  %v440 = vadd.f32 0.0, %v439
  %v441 = vpop.f32.mrb[0].mxu0
  %442 = vmatprep.mubr.bf16.mxu0 0
  %443 = vmatmul.mubr.bf16.gmra.mrb[0].mxu0 %v383
  %v444 = vpop.f32.mrb[0].mxu0
  %v445 = vadd.f32 0.0, %v444
  %v446 = vpop.f32.mrb[0].mxu0
  %v447 = vpop.f32.mrb[0].mxu0
  %v448 = vadd.f32 0.0, %v447
  %v449 = vpop.f32.mrb[0].mxu0
  %450 = vmatprep.mubr.bf16.mxu0 0
  %451 = vmatmul.mubr.bf16.gmra.mrb[0].mxu0 %v386
  %v452 = vpop.f32.mrb[0].mxu0
  %v453 = vadd.f32 0.0, %v452
  %v454 = vpop.f32.mrb[0].mxu0
  %v455 = vpop.f32.mrb[0].mxu0
  %v456 = vadd.f32 0.0, %v455
  %v457 = vpop.f32.mrb[0].mxu0
  %458 = vmatprep.mubr.bf16.mxu0 0
  %459 = vmatmul.mubr.bf16.gmra.mrb[0].mxu0 %v389
  %v460 = vpop.f32.mrb[0].mxu0
  %v461 = vadd.f32 0.0, %v460
  %v462 = vpop.f32.mrb[0].mxu0
  %v463 = vpop.f32.mrb[0].mxu0
  %v464 = vadd.f32 0.0, %v463
  %v465 = vpop.f32.mrb[0].mxu0
  %466 = vmatprep.mubr.bf16.mxu0 0
  %467 = vmatmul.mubr.bf16.gmra.mrb[0].mxu0 %v392
  %v468 = vpop.f32.mrb[0].mxu0
  %v469 = vadd.f32 0.0, %v468
  %v470 = vpop.f32.mrb[0].mxu0
  %v471 = vpop.f32.mrb[0].mxu0
  %v472 = vadd.f32 0.0, %v471
  %v473 = vpop.f32.mrb[0].mxu0
  %474 = vdwg.mxu0
  %475 = vmatprep.subr.bf16.mxu0 0
  %476 = vmatpush1.bf16.msra.mxu0 %v339
  %477 = vmatprep.subr.bf16.mxu0 0
  %478 = vmatpush1.bf16.msra.mxu0 %v340
  %479 = vmatprep.subr.bf16.mxu0 0
  %480 = vmatpush1.bf16.msra.mxu0 %v341
  %481 = vmatprep.subr.bf16.mxu0 0
  %482 = vmatpush1.bf16.msra.mxu0 %v342
  %483 = vmatprep.subr.bf16.mxu0 0
  %484 = vmatpush1.bf16.msra.mxu0 %v343
  %485 = vmatprep.subr.bf16.mxu0 0
  %486 = vmatpush1.bf16.msra.mxu0 %v344
  %487 = vmatprep.subr.bf16.mxu0 0
  %488 = vmatpush1.bf16.msra.mxu0 0
  %489 = vmatprep.subr.bf16.mxu0 0
  %490 = vmatpush1.bf16.msra.mxu0 0
  %491 = vmatprep.subr.bf16.mxu0 0
  %492 = vmatpush1.bf16.msra.mxu0 0
  %493 = vmatprep.subr.bf16.mxu0 0
  %494 = vmatpush1.bf16.msra.mxu0 0
  %495 = vmatprep.subr.bf16.mxu0 0
  %496 = vmatpush1.bf16.msra.mxu0 0
  %497 = vmatprep.subr.bf16.mxu0 0
  %498 = vmatpush1.bf16.msra.mxu0 0
  %499 = vmatprep.subr.bf16.mxu0 0
  %500 = vmatpush1.bf16.msra.mxu0 0
  %501 = vmatprep.subr.bf16.mxu0 0
  %502 = vmatpush1.bf16.msra.mxu0 0
  %503 = vmatprep.subr.bf16.mxu0 0
  %504 = vmatpush1.bf16.msra.mxu0 0
  %505 = vmatprep.subr.bf16.mxu0 0
  %506 = vmatpush1.bf16.msra.mxu0 0
  %507 = vmatprep.mubr.bf16.mxu0 0
  %508 = vmatmul.mubr.bf16.gmra.mrb[0].mxu0 %v377
  %v509 = vpop.f32.mrb[0].mxu0
  %v510 = vadd.f32 %v429, %v509
  %v511 = vpop.f32.mrb[0].mxu0
  %v512 = vpop.f32.mrb[0].mxu0
  %v513 = vadd.f32 %v432, %v512
  %v514 = vpop.f32.mrb[0].mxu0
  %515 = vmatprep.mubr.bf16.mxu0 0
  %516 = vmatmul.mubr.bf16.gmra.mrb[0].mxu0 %v380
  %v517 = vpop.f32.mrb[0].mxu0
  %v518 = vadd.f32 %v437, %v517
  %v519 = vpop.f32.mrb[0].mxu0
  %v520 = vpop.f32.mrb[0].mxu0
  %v521 = vadd.f32 %v440, %v520
  %v522 = vpop.f32.mrb[0].mxu0
  %523 = vmatprep.mubr.bf16.mxu0 0
  %524 = vmatmul.mubr.bf16.gmra.mrb[0].mxu0 %v383
  %v525 = vpop.f32.mrb[0].mxu0
  %v526 = vadd.f32 %v445, %v525
  %v527 = vpop.f32.mrb[0].mxu0
  %v528 = vpop.f32.mrb[0].mxu0
  %v529 = vadd.f32 %v448, %v528
  %v530 = vpop.f32.mrb[0].mxu0
  %531 = vmatprep.mubr.bf16.mxu0 0
  %532 = vmatmul.mubr.bf16.gmra.mrb[0].mxu0 %v386
  %v533 = vpop.f32.mrb[0].mxu0
  %v534 = vadd.f32 %v453, %v533
  %v535 = vpop.f32.mrb[0].mxu0
  %v536 = vpop.f32.mrb[0].mxu0
  %v537 = vadd.f32 %v456, %v536
  %v538 = vpop.f32.mrb[0].mxu0
  %539 = vmatprep.mubr.bf16.mxu0 0
  %540 = vmatmul.mubr.bf16.gmra.mrb[0].mxu0 %v389
  %v541 = vpop.f32.mrb[0].mxu0
  %v542 = vadd.f32 %v461, %v541
  %v543 = vpop.f32.mrb[0].mxu0
  %v544 = vpop.f32.mrb[0].mxu0
  %v545 = vadd.f32 %v464, %v544
  %v546 = vpop.f32.mrb[0].mxu0
  %547 = vmatprep.mubr.bf16.mxu0 0
  %548 = vmatmul.mubr.bf16.gmra.mrb[0].mxu0 %v392
  %v549 = vpop.f32.mrb[0].mxu0
  %v550 = vadd.f32 %v469, %v549
  %v551 = vpop.f32.mrb[0].mxu0
  %v552 = vpop.f32.mrb[0].mxu0
  %v553 = vadd.f32 %v472, %v552
  %v554 = vpop.f32.mrb[0].mxu0
  %555 = vdwg.mxu0
  %v556 = vmul.f32 %v510, 0.04
  %v557 = vmul.f32 %v513, 0.04
  %v558 = vmul.f32 %v518, 0.04
  %v559 = vmul.f32 %v521, 0.04
  %v560 = vmul.f32 %v526, 0.04
  %v561 = vmul.f32 %v529, 0.04
  %v562 = vmul.f32 %v534, 0.04
  %v563 = vmul.f32 %v537, 0.04
  %v564 = vmul.f32 %v542, 0.04
  %v565 = vmul.f32 %v545, 0.04
  %v566 = vmul.f32 %v550, 0.04
  %v567 = vmul.f32 %v553, 0.04
  %vm568 = vcmask 56320
  %569 = vst.msk [vmem:[%s1] sm:$0xff] %vm568, %v556
  %570 = vst.msk [vmem:[%s1 + $0x8] sm:$0xff] %vm568, %v557
  %571 = vst.msk [vmem:[%s1 + $0x10] sm:$0xff] %vm568, %v558
  %572 = vst.msk [vmem:[%s1 + $0x18] sm:$0xff] %vm568, %v559
  %573 = vst.msk [vmem:[%s1 + $0x20] sm:$0xff] %vm568, %v560
  %574 = vst.msk [vmem:[%s1 + $0x28] sm:$0xff] %vm568, %v561
  %575 = vst.msk [vmem:[%s1 + $0x30] sm:$0xff] %vm568, %v562
  %576 = vst.msk [vmem:[%s1 + $0x38] sm:$0xff] %vm568, %v563
  %577 = vst.msk [vmem:[%s1 + $0x40] sm:$0xff] %vm568, %v564
  %578 = vst.msk [vmem:[%s1 + $0x48] sm:$0xff] %vm568, %v565
  %579 = vst.msk [vmem:[%s1 + $0x50] sm:$0xff] %vm568, %v566
  %580 = vst.msk [vmem:[%s1 + $0x58] sm:$0xff] %vm568, %v567
  %s581 = scalar_lea.vmem %s0, 96
  %v582 = vld [vmem:[%s581] sm:$0xff]
  %v583 = vld [vmem:[%s581 + $0x8] sm:$0xff]
  %v584 = vld [vmem:[%s581 + $0x10] sm:$0xff]
  %v585 = vld [vmem:[%s581 + $0x18] sm:$0xff]
  %v586 = vld [vmem:[%s581 + $0x20] sm:$0xff]
  %v587 = vld [vmem:[%s581 + $0x28] sm:$0xff]
  %v588 = vld [vmem:[%s581 + $0x30] sm:$0xff]
  %v589 = vld [vmem:[%s581 + $0x38] sm:$0xff]
  %v590 = vld [vmem:[%s581 + $0x40] sm:$0xff]
  %v591 = vld [vmem:[%s581 + $0x48] sm:$0xff]
  %v592 = vld [vmem:[%s581 + $0x50] sm:$0xff]
  %v593 = vld [vmem:[%s581 + $0x58] sm:$0xff]
  %v594 = vpack.c.bf16 %v583, %v582
  %v595 = vpack.c.bf16 %v585, %v584
  %v596 = vpack.c.bf16 %v587, %v586
  %v597 = vpack.c.bf16 %v589, %v588
  %v598 = vpack.c.bf16 %v591, %v590
  %v599 = vpack.c.bf16 %v593, %v592
  %v600 = vunpack.c.l.bf16 %v594
  %v601 = vunpack.c.h.bf16 %v594
  %v602 = vunpack.c.l.bf16 %v595
  %v603 = vunpack.c.h.bf16 %v595
  %v604 = vunpack.c.l.bf16 %v596
  %v605 = vunpack.c.h.bf16 %v596
  %v606 = vunpack.c.l.bf16 %v597
  %v607 = vunpack.c.h.bf16 %v597
  %v608 = vunpack.c.l.bf16 %v598
  %v609 = vunpack.c.h.bf16 %v598
  %v610 = vunpack.c.l.bf16 %v599
  %v611 = vunpack.c.h.bf16 %v599
  %v612 = vsub.f32 %v582, %v600
  %v613 = vsub.f32 %v583, %v601
  %v614 = vsub.f32 %v584, %v602
  %v615 = vsub.f32 %v585, %v603
  %v616 = vsub.f32 %v586, %v604
  %v617 = vsub.f32 %v587, %v605
  %v618 = vsub.f32 %v588, %v606
  %v619 = vsub.f32 %v589, %v607
  %v620 = vsub.f32 %v590, %v608
  %v621 = vsub.f32 %v591, %v609
  %v622 = vsub.f32 %v592, %v610
  %v623 = vsub.f32 %v593, %v611
  %v624 = vpack.c.bf16 %v613, %v612
  %v625 = vpack.c.bf16 %v615, %v614
  %v626 = vpack.c.bf16 %v617, %v616
  %v627 = vpack.c.bf16 %v619, %v618
  %v628 = vpack.c.bf16 %v621, %v620
  %v629 = vpack.c.bf16 %v623, %v622
  %630 = vmatprep.subr.bf16.mxu0 0
  %631 = vmatpush1.bf16.msra.mxu0 %v624
  %632 = vmatprep.subr.bf16.mxu0 0
  %633 = vmatpush1.bf16.msra.mxu0 %v625
  %634 = vmatprep.subr.bf16.mxu0 0
  %635 = vmatpush1.bf16.msra.mxu0 %v626
  %636 = vmatprep.subr.bf16.mxu0 0
  %637 = vmatpush1.bf16.msra.mxu0 %v627
  %638 = vmatprep.subr.bf16.mxu0 0
  %639 = vmatpush1.bf16.msra.mxu0 %v628
  %640 = vmatprep.subr.bf16.mxu0 0
  %641 = vmatpush1.bf16.msra.mxu0 %v629
  %642 = vmatprep.subr.bf16.mxu0 0
  %643 = vmatpush1.bf16.msra.mxu0 0
  %644 = vmatprep.subr.bf16.mxu0 0
  %645 = vmatpush1.bf16.msra.mxu0 0
  %646 = vmatprep.subr.bf16.mxu0 0
  %647 = vmatpush1.bf16.msra.mxu0 0
  %648 = vmatprep.subr.bf16.mxu0 0
  %649 = vmatpush1.bf16.msra.mxu0 0
  %650 = vmatprep.subr.bf16.mxu0 0
  %651 = vmatpush1.bf16.msra.mxu0 0
  %652 = vmatprep.subr.bf16.mxu0 0
  %653 = vmatpush1.bf16.msra.mxu0 0
  %654 = vmatprep.subr.bf16.mxu0 0
  %655 = vmatpush1.bf16.msra.mxu0 0
  %656 = vmatprep.subr.bf16.mxu0 0
  %657 = vmatpush1.bf16.msra.mxu0 0
  %658 = vmatprep.subr.bf16.mxu0 0
  %659 = vmatpush1.bf16.msra.mxu0 0
  %660 = vmatprep.subr.bf16.mxu0 0
  %661 = vmatpush1.bf16.msra.mxu0 0
  %662 = vmatprep.mubr.bf16.mxu0 0
  %663 = vmatmul.mubr.bf16.gmra.mrb[0].mxu0 %v377
  %v664 = vpop.f32.mrb[0].mxu0
  %v665 = vadd.f32 0.0, %v664
  %v666 = vpop.f32.mrb[0].mxu0
  %v667 = vpop.f32.mrb[0].mxu0
  %v668 = vadd.f32 0.0, %v667
  %v669 = vpop.f32.mrb[0].mxu0
  %670 = vmatprep.mubr.bf16.mxu0 0
  %671 = vmatmul.mubr.bf16.gmra.mrb[0].mxu0 %v380
  %v672 = vpop.f32.mrb[0].mxu0
  %v673 = vadd.f32 0.0, %v672
  %v674 = vpop.f32.mrb[0].mxu0
  %v675 = vpop.f32.mrb[0].mxu0
  %v676 = vadd.f32 0.0, %v675
  %v677 = vpop.f32.mrb[0].mxu0
  %678 = vmatprep.mubr.bf16.mxu0 0
  %679 = vmatmul.mubr.bf16.gmra.mrb[0].mxu0 %v383
  %v680 = vpop.f32.mrb[0].mxu0
  %v681 = vadd.f32 0.0, %v680
  %v682 = vpop.f32.mrb[0].mxu0
  %v683 = vpop.f32.mrb[0].mxu0
  %v684 = vadd.f32 0.0, %v683
  %v685 = vpop.f32.mrb[0].mxu0
  %686 = vmatprep.mubr.bf16.mxu0 0
  %687 = vmatmul.mubr.bf16.gmra.mrb[0].mxu0 %v386
  %v688 = vpop.f32.mrb[0].mxu0
  %v689 = vadd.f32 0.0, %v688
  %v690 = vpop.f32.mrb[0].mxu0
  %v691 = vpop.f32.mrb[0].mxu0
  %v692 = vadd.f32 0.0, %v691
  %v693 = vpop.f32.mrb[0].mxu0
  %694 = vmatprep.mubr.bf16.mxu0 0
  %695 = vmatmul.mubr.bf16.gmra.mrb[0].mxu0 %v389
  %v696 = vpop.f32.mrb[0].mxu0
  %v697 = vadd.f32 0.0, %v696
  %v698 = vpop.f32.mrb[0].mxu0
  %v699 = vpop.f32.mrb[0].mxu0
  %v700 = vadd.f32 0.0, %v699
  %v701 = vpop.f32.mrb[0].mxu0
  %702 = vmatprep.mubr.bf16.mxu0 0
  %703 = vmatmul.mubr.bf16.gmra.mrb[0].mxu0 %v392
  %v704 = vpop.f32.mrb[0].mxu0
  %v705 = vadd.f32 0.0, %v704
  %v706 = vpop.f32.mrb[0].mxu0
  %v707 = vpop.f32.mrb[0].mxu0
  %v708 = vadd.f32 0.0, %v707
  %v709 = vpop.f32.mrb[0].mxu0
  %710 = vdwg.mxu0
  %711 = vmatprep.subr.bf16.mxu0 0
  %712 = vmatpush1.bf16.msra.mxu0 %v594
  %713 = vmatprep.subr.bf16.mxu0 0
  %714 = vmatpush1.bf16.msra.mxu0 %v595
  %715 = vmatprep.subr.bf16.mxu0 0
  %716 = vmatpush1.bf16.msra.mxu0 %v596
  %717 = vmatprep.subr.bf16.mxu0 0
  %718 = vmatpush1.bf16.msra.mxu0 %v597
  %719 = vmatprep.subr.bf16.mxu0 0
  %720 = vmatpush1.bf16.msra.mxu0 %v598
  %721 = vmatprep.subr.bf16.mxu0 0
  %722 = vmatpush1.bf16.msra.mxu0 %v599
  %723 = vmatprep.subr.bf16.mxu0 0
  %724 = vmatpush1.bf16.msra.mxu0 0
  %725 = vmatprep.subr.bf16.mxu0 0
  %726 = vmatpush1.bf16.msra.mxu0 0
  %727 = vmatprep.subr.bf16.mxu0 0
  %728 = vmatpush1.bf16.msra.mxu0 0
  %729 = vmatprep.subr.bf16.mxu0 0
  %730 = vmatpush1.bf16.msra.mxu0 0
  %731 = vmatprep.subr.bf16.mxu0 0
  %732 = vmatpush1.bf16.msra.mxu0 0
  %733 = vmatprep.subr.bf16.mxu0 0
  %734 = vmatpush1.bf16.msra.mxu0 0
  %735 = vmatprep.subr.bf16.mxu0 0
  %736 = vmatpush1.bf16.msra.mxu0 0
  %737 = vmatprep.subr.bf16.mxu0 0
  %738 = vmatpush1.bf16.msra.mxu0 0
  %739 = vmatprep.subr.bf16.mxu0 0
  %740 = vmatpush1.bf16.msra.mxu0 0
  %741 = vmatprep.subr.bf16.mxu0 0
  %742 = vmatpush1.bf16.msra.mxu0 0
  %743 = vmatprep.mubr.bf16.mxu0 0
  %744 = vmatmul.mubr.bf16.gmra.mrb[0].mxu0 %v377
  %v745 = vpop.f32.mrb[0].mxu0
  %v746 = vadd.f32 %v665, %v745
  %v747 = vpop.f32.mrb[0].mxu0
  %v748 = vpop.f32.mrb[0].mxu0
  %v749 = vadd.f32 %v668, %v748
  %v750 = vpop.f32.mrb[0].mxu0
  %751 = vmatprep.mubr.bf16.mxu0 0
  %752 = vmatmul.mubr.bf16.gmra.mrb[0].mxu0 %v380
  %v753 = vpop.f32.mrb[0].mxu0
  %v754 = vadd.f32 %v673, %v753
  %v755 = vpop.f32.mrb[0].mxu0
  %v756 = vpop.f32.mrb[0].mxu0
  %v757 = vadd.f32 %v676, %v756
  %v758 = vpop.f32.mrb[0].mxu0
  %759 = vmatprep.mubr.bf16.mxu0 0
  %760 = vmatmul.mubr.bf16.gmra.mrb[0].mxu0 %v383
  %v761 = vpop.f32.mrb[0].mxu0
  %v762 = vadd.f32 %v681, %v761
  %v763 = vpop.f32.mrb[0].mxu0
  %v764 = vpop.f32.mrb[0].mxu0
  %v765 = vadd.f32 %v684, %v764
  %v766 = vpop.f32.mrb[0].mxu0
  %767 = vmatprep.mubr.bf16.mxu0 0
  %768 = vmatmul.mubr.bf16.gmra.mrb[0].mxu0 %v386
  %v769 = vpop.f32.mrb[0].mxu0
  %v770 = vadd.f32 %v689, %v769
  %v771 = vpop.f32.mrb[0].mxu0
  %v772 = vpop.f32.mrb[0].mxu0
  %v773 = vadd.f32 %v692, %v772
  %v774 = vpop.f32.mrb[0].mxu0
  %775 = vmatprep.mubr.bf16.mxu0 0
  %776 = vmatmul.mubr.bf16.gmra.mrb[0].mxu0 %v389
  %v777 = vpop.f32.mrb[0].mxu0
  %v778 = vadd.f32 %v697, %v777
  %v779 = vpop.f32.mrb[0].mxu0
  %v780 = vpop.f32.mrb[0].mxu0
  %v781 = vadd.f32 %v700, %v780
  %v782 = vpop.f32.mrb[0].mxu0
  %783 = vmatprep.mubr.bf16.mxu0 0
  %784 = vmatmul.mubr.bf16.gmra.mrb[0].mxu0 %v392
  %v785 = vpop.f32.mrb[0].mxu0
  %v786 = vadd.f32 %v705, %v785
  %v787 = vpop.f32.mrb[0].mxu0
  %v788 = vpop.f32.mrb[0].mxu0
  %v789 = vadd.f32 %v708, %v788
  %v790 = vpop.f32.mrb[0].mxu0
  %791 = vdwg.mxu0
  %v792 = vmul.f32 %v746, 0.04
  %v793 = vmul.f32 %v749, 0.04
  %v794 = vmul.f32 %v754, 0.04
  %v795 = vmul.f32 %v757, 0.04
  %v796 = vmul.f32 %v762, 0.04
  %v797 = vmul.f32 %v765, 0.04
  %v798 = vmul.f32 %v770, 0.04
  %v799 = vmul.f32 %v773, 0.04
  %v800 = vmul.f32 %v778, 0.04
  %v801 = vmul.f32 %v781, 0.04
  %v802 = vmul.f32 %v786, 0.04
  %v803 = vmul.f32 %v789, 0.04
  %s804 = scalar_lea.vmem %s1, 96
  %805 = vst.msk [vmem:[%s804] sm:$0xff] %vm568, %v792
  %806 = vst.msk [vmem:[%s804 + $0x8] sm:$0xff] %vm568, %v793
  %807 = vst.msk [vmem:[%s804 + $0x10] sm:$0xff] %vm568, %v794
  %808 = vst.msk [vmem:[%s804 + $0x18] sm:$0xff] %vm568, %v795
  %809 = vst.msk [vmem:[%s804 + $0x20] sm:$0xff] %vm568, %v796
  %810 = vst.msk [vmem:[%s804 + $0x28] sm:$0xff] %vm568, %v797
  %811 = vst.msk [vmem:[%s804 + $0x30] sm:$0xff] %vm568, %v798
  %812 = vst.msk [vmem:[%s804 + $0x38] sm:$0xff] %vm568, %v799
  %813 = vst.msk [vmem:[%s804 + $0x40] sm:$0xff] %vm568, %v800
  %814 = vst.msk [vmem:[%s804 + $0x48] sm:$0xff] %vm568, %v801
  %815 = vst.msk [vmem:[%s804 + $0x50] sm:$0xff] %vm568, %v802
  %816 = vst.msk [vmem:[%s804 + $0x58] sm:$0xff] %vm568, %v803
  // Predicated region
  $region10: #{tpu_custom_call.1} parent=0 // pred_check
    _
  $region11: #{tpu_custom_call.1} parent=0 // pred_check_branch
    %818 = sbr.rel (0) target = $region13
  $region12: #{tpu_custom_call.1} parent=0 // pred_region
    _
  $region13: #{tpu_custom_call.1} parent=0 // pred_fallthru
    _
  // Predicated region
  $region14: #{tpu_custom_call.1} parent=0 // pred_check
    _
  $region15: #{tpu_custom_call.1} parent=0 // pred_check_branch
    %820 = sbr.rel (0) target = $region17
  $region16: #{tpu_custom_call.1} parent=0 // pred_region
    _
  $region17: #{tpu_custom_call.1} parent=0 // pred_fallthru
    _

</llo_original>
